<compile_context>
chip_gen: v6e
topology: v6e:2x2x1
jax: 0.10.0
libtpu: 0.0.40
codegen_flags: <defaults>
</compile_context>

<pallas_src>
import jax
import jax.numpy as jnp
from jax.experimental import pallas as pl
from jax.experimental.pallas import tpu as pltpu

LANE = 128   # vreg lane width (last dim)
SUB = 8      # f32 sublane count (second-to-last dim)


def _round_up(x, m):
    return (x + m - 1) // m * m


# ---------------------------------------------------------------------------
# Kernel bodies
# ---------------------------------------------------------------------------
def _mlp_fused_kernel(x_ref, w1_ref, b1_ref, w2_ref, b2_ref, o_ref):
    """Whole hidden dim VMEM-resident: fc1 -> ReLU -> fc2 -> sigmoid fused."""
    h = jnp.dot(x_ref[...], w1_ref[...], preferred_element_type=jnp.float32)   # MXU
    h = jnp.maximum(h + b1_ref[...], 0.0)                                      # VPU, f32
    y = jnp.dot(h.astype(w2_ref.dtype), w2_ref[...],
                preferred_element_type=jnp.float32)                            # MXU
    o_ref[...] = jax.nn.sigmoid(y + b2_ref[...]).astype(o_ref.dtype)           # EUP


def _mlp_htiled_kernel(x_ref, w1_ref, b1_ref, w2_ref, b2_ref, o_ref, acc_ref):
    """Hidden dim streamed in blocks (grid axis 1); fc2 accumulated in f32 VMEM."""
    hk = pl.program_id(1)

    @pl.when(hk == 0)
    def _():
        acc_ref[...] = jnp.zeros_like(acc_ref)

    h = jnp.dot(x_ref[...], w1_ref[...], preferred_element_type=jnp.float32)
    h = jnp.maximum(h + b1_ref[...], 0.0)
    acc_ref[...] += jnp.dot(h.astype(w2_ref.dtype), w2_ref[...],
                            preferred_element_type=jnp.float32)

    @pl.when(hk == pl.num_programs(1) - 1)
    def _():
        o_ref[...] = jax.nn.sigmoid(acc_ref[...] + b2_ref[...]).astype(o_ref.dtype)


# ---------------------------------------------------------------------------
# Wrapper
# ---------------------------------------------------------------------------
def _const_spec(shape, index_map):
    """Grid-invariant block: single-buffer it (double-buffering it is pure VMEM waste)."""
    try:
        return pl.BlockSpec(shape, index_map, pipeline_mode=pl.Buffered(1))
    except (TypeError, AttributeError):   # very old jax without pipeline_mode
        return pl.BlockSpec(shape, index_map)


def _pick_batch_tile(b_pad, in_p, h_p, out_p, in_bytes, out_bytes):
    """Adaptive batch tile: big (amortize ~0.35us/grid step) but VMEM-sane, and
    leaving >=2 grid steps when the batch allows (v7x has 2 TensorCores)."""
    act_budget = 8 << 20  # VMEM budget for per-step activation buffers
    per_row = 2 * (in_bytes * in_p + out_bytes * out_p) + 4 * (h_p + out_p)
    tb = min(1024, b_pad, max(SUB, (act_budget // per_row) // SUB * SUB))
    if b_pad >= 2 * SUB:
        tb = min(tb, _round_up(-(-b_pad // 2), SUB))   # ensure >= 2 grid steps
    return max(SUB, (tb // SUB) * SUB)


def make_two_layer_perceptron(w1, b1, w2, b2, *,
                              compute_dtype=jnp.bfloat16,
                              out_dtype=None,
                              max_resident_weight_bytes=48 << 20,
                              trim_output=True):
    """Build a fused Pallas forward for fc1 -> ReLU -> fc2 -> sigmoid.

    w1: (in, h), b1: (h,), w2: (h, out), b2: (out,).  Padding / casting of the
    parameters happens ONCE here, not on every forward call.
    """
    in_size, h_size = w1.shape
    out_size = w2.shape[1]
    cdt = jnp.dtype(compute_dtype)
    wbytes = cdt.itemsize

    in_p = _round_up(in_size, LANE)
    out_p = _round_up(out_size, LANE)
    h_p = _round_up(h_size, LANE)

    # Decide: whole weight set VMEM-resident (single-buffered) vs. h-streamed.
    weight_bytes = wbytes * (in_p * h_p + h_p * out_p)
    if weight_bytes <= max_resident_weight_bytes:
        th = h_p
    else:
        per_h_col = wbytes * (in_p + out_p)          # one hidden column: w1 col + w2 row
        th = (max_resident_weight_bytes // (2 * per_h_col)) // LANE * LANE
        th = int(max(LANE, min(th, h_p)))
        h_p = _round_up(h_p, th)                     # keep th an exact divisor of h_p
    n_h = h_p // th

    # --- one-time parameter padding / casting (zero padding is numerically inert:
    #     padded weight rows/cols and bias entries are 0, ReLU(0)=0, and padded
    #     output columns are sliced away) ---
    w1p = jnp.pad(jnp.asarray(w1), ((0, in_p - in_size), (0, h_p - h_size))).astype(cdt)
    w2p = jnp.pad(jnp.asarray(w2), ((0, h_p - h_size), (0, out_p - out_size))).astype(cdt)
    b1p = jnp.pad(jnp.asarray(b1), (0, h_p - h_size)).reshape(1, h_p).astype(jnp.float32)
    b2p = jnp.pad(jnp.asarray(b2), (0, out_p - out_size)).reshape(1, out_p).astype(jnp.float32)

    def _forward(x):
        B = x.shape[0]
        odt = jnp.dtype(out_dtype) if out_dtype is not None else jnp.dtype(x.dtype)

        tb = _pick_batch_tile(_round_up(B, SUB), in_p, h_p, out_p, wbytes, odt.itemsize)
        b_pad = _round_up(_round_up(B, SUB), tb)
        grid_b = b_pad // tb

        xp = jnp.pad(x, ((0, b_pad - B), (0, in_p - in_size))).astype(cdt)

        # Advisory cost hint so XLA schedules surrounding ops sensibly.
        cost = pl.CostEstimate(
            flops=int(2 * B * (in_size * h_size + h_size * out_size)),
            transcendentals=int(B * out_size),
            bytes_accessed=int(xp.size * wbytes + (w1p.size + w2p.size) * wbytes
                               + (b1p.size + b2p.size) * 4
                               + b_pad * out_p * odt.itemsize),
        )

        if n_h == 1:
            vmem_needed = (weight_bytes                      # resident weights (1 buffer)
                           + 4 * (h_p + out_p)               # f32 biases
                           + 2 * tb * in_p * wbytes          # x tile, double-buffered
                           + 2 * tb * out_p * odt.itemsize   # out tile, double-buffered
                           + 4 * tb * (h_p + out_p))         # f32 intermediates
            vmem_limit = max(16 << 20, min(int(vmem_needed * 1.5) + (2 << 20), 100 << 20))
            out_padded = pl.pallas_call(
                _mlp_fused_kernel,
                out_shape=jax.ShapeDtypeStruct((b_pad, out_p), odt),
                grid=(grid_b,),
                in_specs=[
                    pl.BlockSpec((tb, in_p), lambda i: (i, 0)),     # activations stream
                    _const_spec((in_p, h_p), lambda i: (0, 0)),     # weights: VMEM-resident,
                    _const_spec((1, h_p), lambda i: (0, 0)),        # single-buffered
                    _const_spec((h_p, out_p), lambda i: (0, 0)),
                    _const_spec((1, out_p), lambda i: (0, 0)),
                ],
                out_specs=pl.BlockSpec((tb, out_p), lambda i: (i, 0)),
                compiler_params=pltpu.CompilerParams(
                    dimension_semantics=("parallel",),
                    vmem_limit_bytes=vmem_limit,
                ),
                cost_estimate=cost,
            )(xp, w1p, b1p, w2p, b2p)
        else:
            vmem_needed = (2 * th * (in_p + out_p) * wbytes   # streamed w1/w2 tiles (2 bufs)
                           + 2 * th * 4 + out_p * 4           # b1 tiles + b2
                           + 2 * tb * in_p * wbytes
                           + 2 * tb * out_p * odt.itemsize
                           + tb * out_p * 4                   # f32 accumulator scratch
                           + 4 * tb * (th + out_p))           # f32 intermediates
            vmem_limit = max(16 << 20, min(int(vmem_needed * 1.5) + (2 << 20), 100 << 20))
            out_padded = pl.pallas_call(
                _mlp_htiled_kernel,
                out_shape=jax.ShapeDtypeStruct((b_pad, out_p), odt),
                grid=(grid_b, n_h),                           # reduction (h) axis last
                in_specs=[
                    pl.BlockSpec((tb, in_p), lambda i, k: (i, 0)),
                    pl.BlockSpec((in_p, th), lambda i, k: (0, k)),
                    pl.BlockSpec((1, th), lambda i, k: (0, k)),
                    pl.BlockSpec((th, out_p), lambda i, k: (k, 0)),
                    _const_spec((1, out_p), lambda i, k: (0, 0)),
                ],
                out_specs=pl.BlockSpec((tb, out_p), lambda i, k: (i, 0)),
                scratch_shapes=[pltpu.VMEM((tb, out_p), jnp.float32)],
                compiler_params=pltpu.CompilerParams(
                    dimension_semantics=("parallel", "arbitrary"),
                    vmem_limit_bytes=vmem_limit,
                ),
                cost_estimate=cost,
            )(xp, w1p, b1p, w2p, b2p)

        if trim_output:
            return out_padded[:B, :out_size]
        return out_padded   # padded lane-dense layout, if the consumer accepts it

    return jax.jit(_forward)


def reference(x, w1, b1, w2, b2):
    h = jnp.maximum(x @ w1 + b1, 0.0)
    return jax.nn.sigmoid(h @ w2 + b2)


def _init_linear(key, fan_in, fan_out):
    # Mimics nn.Linear's uniform(-1/sqrt(fan_in), 1/sqrt(fan_in)) init.
    kw, kb = jax.random.split(key)
    lim = 1.0 / jnp.sqrt(jnp.float32(fan_in))
    w = jax.random.uniform(kw, (fan_in, fan_out), jnp.float32, -lim, lim)
    b = jax.random.uniform(kb, (fan_out,), jnp.float32, -lim, lim)
    return w, b


if __name__ == "__main__":
    B, IN, H, OUT = 8, 32, 64, 16
    key = jax.random.PRNGKey(0)
    kx, k1, k2, k3, k4 = jax.random.split(key, 5)

    x = jax.random.normal(kx, (B, IN), dtype=jnp.float32)
    w1, b1 = _init_linear(k1, IN, H)
    w2, b2 = _init_linear(k2, H, OUT)
    ref = reference(x, w1, b1, w2, b2)

    # 1) f32 compute path (exact match against pure-JAX reference)
    fwd_f32 = make_two_layer_perceptron(w1, b1, w2, b2, compute_dtype=jnp.float32)
    out_f32 = jax.block_until_ready(fwd_f32(x))
    assert out_f32.shape == (B, OUT)
    assert jnp.allclose(out_f32, ref, atol=1e-5, rtol=1e-5)

    # 2) default bf16 compute path (MXU-native on v5e/v6e/v7x; f32 accumulation)
    fwd_bf16 = make_two_layer_perceptron(w1, b1, w2, b2)
    out_bf16 = jax.block_until_ready(fwd_bf16(x))
    assert out_bf16.shape == (B, OUT)
    assert jnp.allclose(out_bf16, ref, atol=4e-2, rtol=4e-2)

    # 3) h-tiled accumulator path (forced via a tiny resident-weight budget),
    #    exercising the VMEM guard large hiddens rely on for v7x's 64 MiB/TC.
    H2 = 384
    w1b, b1b = _init_linear(k3, IN, H2)
    w2b, b2b = _init_linear(k4, H2, OUT)
    fwd_tiled = make_two_layer_perceptron(
        w1b, b1b, w2b, b2b, compute_dtype=jnp.float32,
        max_resident_weight_bytes=64 * 1024)
    out_tiled = jax.block_until_ready(fwd_tiled(x))
    ref2 = reference(x, w1b, b1b, w2b, b2b)
    assert out_tiled.shape == (B, OUT)
    assert jnp.allclose(out_tiled, ref2, atol=1e-4, rtol=1e-4)

    print("KERNEL_OK")
</pallas_src>

<mosaic_0001>
module attributes {stable_mosaic.version = 11 : i64} {
  func.func @_mlp_fused_kernel(%arg0: i32, %arg1: memref<8x128xf32, #tpu.memory_space<vmem>>, %arg2: memref<128x128xf32, #tpu.memory_space<vmem>>, %arg3: memref<1x128xf32, #tpu.memory_space<vmem>>, %arg4: memref<128x128xf32, #tpu.memory_space<vmem>>, %arg5: memref<1x128xf32, #tpu.memory_space<vmem>>, %arg6: memref<8x128xf32, #tpu.memory_space<vmem>>) attributes {dimension_semantics = [#tpu.dimension_semantics<parallel>], iteration_bounds = array<i64: 1>, scalar_prefetch = 0 : i64, scratch_operands = 0 : i64, tpu.core_type = #tpu.core_type<tc>, window_params = [{transform_indices = @transform_0, window_bounds = array<i64: 8, 128>}, {pipeline_mode = #tpu.pipeline_mode<synchronous>, transform_indices = @transform_1, window_bounds = array<i64: 128, 128>}, {pipeline_mode = #tpu.pipeline_mode<synchronous>, transform_indices = @transform_2, window_bounds = array<i64: 1, 128>}, {pipeline_mode = #tpu.pipeline_mode<synchronous>, transform_indices = @transform_3, window_bounds = array<i64: 128, 128>}, {pipeline_mode = #tpu.pipeline_mode<synchronous>, transform_indices = @transform_4, window_bounds = array<i64: 1, 128>}, {transform_indices = @transform_5, window_bounds = array<i64: 8, 128>}]} {
    %c0 = arith.constant 0 : index
    %c0_0 = arith.constant 0 : index
    %0 = vector.load %arg1[%c0, %c0_0] : memref<8x128xf32, #tpu.memory_space<vmem>>, vector<8x128xf32>
    %c0_1 = arith.constant 0 : index
    %c0_2 = arith.constant 0 : index
    %1 = vector.load %arg2[%c0_1, %c0_2] : memref<128x128xf32, #tpu.memory_space<vmem>>, vector<128x128xf32>
    %cst = arith.constant dense<0.000000e+00> : vector<8x128xf32>
    %2 = tpu.matmul %0, %1, %cst {dimension_numbers = #tpu.dot_dimension_numbers<[1], [0], [0], [1], [0, 0, 1, 1], [], []>} : vector<8x128xf32>, vector<128x128xf32>, vector<8x128xf32> -> vector<8x128xf32>
    %c0_3 = arith.constant 0 : index
    %c0_4 = arith.constant 0 : index
    %3 = vector.load %arg3[%c0_3, %c0_4] : memref<1x128xf32, #tpu.memory_space<vmem>>, vector<1x128xf32>
    %4 = vector.broadcast %3 : vector<1x128xf32> to vector<8x128xf32>
    %5 = arith.addf %2, %4 : vector<8x128xf32>
    %cst_5 = arith.constant 0.000000e+00 : f32
    %6 = vector.broadcast %cst_5 : f32 to vector<8x128xf32>
    %7 = arith.maximumf %5, %6 : vector<8x128xf32>
    %c0_6 = arith.constant 0 : index
    %c0_7 = arith.constant 0 : index
    %8 = vector.load %arg4[%c0_6, %c0_7] : memref<128x128xf32, #tpu.memory_space<vmem>>, vector<128x128xf32>
    %cst_8 = arith.constant dense<0.000000e+00> : vector<8x128xf32>
    %9 = tpu.matmul %7, %8, %cst_8 {dimension_numbers = #tpu.dot_dimension_numbers<[1], [0], [0], [1], [0, 0, 1, 1], [], []>} : vector<8x128xf32>, vector<128x128xf32>, vector<8x128xf32> -> vector<8x128xf32>
    %c0_9 = arith.constant 0 : index
    %c0_10 = arith.constant 0 : index
    %10 = vector.load %arg5[%c0_9, %c0_10] : memref<1x128xf32, #tpu.memory_space<vmem>>, vector<1x128xf32>
    %11 = vector.broadcast %10 : vector<1x128xf32> to vector<8x128xf32>
    %12 = arith.addf %9, %11 : vector<8x128xf32>
    %13 = arith.negf %12 : vector<8x128xf32>
    %14 = math.exp %13 : vector<8x128xf32>
    %cst_11 = arith.constant 1.000000e+00 : f32
    %15 = vector.broadcast %cst_11 : f32 to vector<8x128xf32>
    %16 = arith.addf %15, %14 : vector<8x128xf32>
    %17 = arith.divf %15, %16 : vector<8x128xf32>
    %c0_12 = arith.constant 0 : index
    %c0_13 = arith.constant 0 : index
    %18 = vector.load %arg6[%c0_12, %c0_13] : memref<8x128xf32, #tpu.memory_space<vmem>>, vector<8x128xf32>
    tpu.vector_store %arg6[%c0_12, %c0_13], %17 {strides = array<i32>} : memref<8x128xf32, #tpu.memory_space<vmem>>, vector<8x128xf32>,
    return
  }
  func.func @transform_0(%arg0: i32) -> (i32, i32) {
    %c0_i32 = arith.constant 0 : i32
    %c0_i32_0 = arith.constant 0 : i32
    return %arg0, %c0_i32 : i32, i32
  }
  func.func @transform_1(%arg0: i32) -> (i32, i32) {
    %c0_i32 = arith.constant 0 : i32
    %c0_i32_0 = arith.constant 0 : i32
    %c0_i32_1 = arith.constant 0 : i32
    return %c0_i32, %c0_i32_0 : i32, i32
  }
  func.func @transform_2(%arg0: i32) -> (i32, i32) {
    %c0_i32 = arith.constant 0 : i32
    %c0_i32_0 = arith.constant 0 : i32
    %c0_i32_1 = arith.constant 0 : i32
    return %c0_i32, %c0_i32_0 : i32, i32
  }
  func.func @transform_3(%arg0: i32) -> (i32, i32) {
    %c0_i32 = arith.constant 0 : i32
    %c0_i32_0 = arith.constant 0 : i32
    %c0_i32_1 = arith.constant 0 : i32
    return %c0_i32, %c0_i32_0 : i32, i32
  }
  func.func @transform_4(%arg0: i32) -> (i32, i32) {
    %c0_i32 = arith.constant 0 : i32
    %c0_i32_0 = arith.constant 0 : i32
    %c0_i32_1 = arith.constant 0 : i32
    return %c0_i32, %c0_i32_0 : i32, i32
  }
  func.func @transform_5(%arg0: i32) -> (i32, i32) {
    %c0_i32 = arith.constant 0 : i32
    %c0_i32_0 = arith.constant 0 : i32
    return %arg0, %c0_i32 : i32, i32
  }
}

</mosaic_0001>

<llo_original>
// kernel: _forward.1
$region0: #{_forward.1}
  #allocation0 [shape = 'u32[]', space=smem, size = 0x4, offset = 0x4, fixed_abs, tag = 'smem constant byte address 0x4 - core index']
  #allocation1 [shape = 'u32[144,128]{1,0:T(1,128)}', space=vmem, size = 0x12000, scoped, tag = 'internal scratch']
  %s0 = inlined_call_operand.vmem [shape: f32[8,128], index: 0, kind: input, shape index: {}]
  %s1 = inlined_call_operand.hbm [shape: f32[128,128], index: 1, kind: input, shape index: {}]
  %s2 = inlined_call_operand.vmem [shape: f32[1,128], index: 2, kind: input, shape index: {}]
  %s3 = inlined_call_operand.hbm [shape: f32[128,128], index: 3, kind: input, shape index: {}]
  %s4 = inlined_call_operand.vmem [shape: f32[1,128], index: 4, kind: input, shape index: {}]
  %s5 = inlined_call_operand.hbm [shape: f32[8,128], index: 5, kind: output, shape index: {}]
  %s6 = sld [smem:[#allocation0]]
  $region38: #{_forward.1} parent=0
    _
  %s8 = ssub.s32 1, %s6
  %s9 = scalar_select 0, %s8, %s6
  $region1: #{_forward.1} parent=0
    #allocation2 [shape = 'u8[65536]{0}', space=vmem, size = 0x10000, scoped, tag = 'input window, operand 1, single buffered']
    #allocation3 [shape = 's32[1]{0}', space=sflag, size = 0x4, scoped, tag = 'scoped memory for _forward.1']
    #allocation4 [shape = 's32[1]{0}', space=sflag, size = 0x4, scoped, tag = 'scoped memory for _forward.1']
    #allocation5 [shape = 'u8[65536]{0}', space=vmem, size = 0x10000, scoped, tag = 'input window, operand 3, single buffered']
    #allocation6 [shape = 's32[1]{0}', space=sflag, size = 0x4, scoped, tag = 'scoped memory for _forward.1']
    #allocation7 [shape = 'u8[4096]{0}', space=vmem, size = 0x1000, scoped, tag = 'output window, operand 0, single buffered']
    %10 = vsyncpa [#allocation3], 0
    %11 = vsyncpa [#allocation6], 0
    %12 = vsyncpa [#allocation4], 0
    // Predicated region
    $region2: #{_forward.1} parent=1 // pred_check
      _
    $region3: #{_forward.1} parent=1 // pred_check_branch
      %14 = sbr.rel (0) target = $region5
    $region4: #{_forward.1} parent=1 // pred_region
      _
    $region5: #{_forward.1} parent=1 // pred_fallthru
      _
    // Predicated region
    $region6: #{_forward.1} parent=1 // pred_check
      _
    $region7: #{_forward.1} parent=1 // pred_check_branch
      %16 = sbr.rel (0) target = $region9
    $region8: #{_forward.1} parent=1 // pred_region
      %s18 = ssub.s32 2048, 2048
      %19 = vsyncadd [#allocation3], %s18
      %s20 = sshll.u32 [#allocation2], 4
      %s21 = int_to_ptr.vmem [resolvable:$true] %s20
      %26 = dma.hbm_to_vmem [thread:$0]  %s1, 2048, %s21, [#allocation3], 128, 128, 8
    $region9: #{_forward.1} parent=1 // pred_fallthru
      _
    // Predicated region
    $region10: #{_forward.1} parent=1 // pred_check
      _
    $region11: #{_forward.1} parent=1 // pred_check_branch
      %28 = sbr.rel (0) target = $region13
    $region12: #{_forward.1} parent=1 // pred_region
      _
    $region13: #{_forward.1} parent=1 // pred_fallthru
      _
    // Predicated region
    $region14: #{_forward.1} parent=1 // pred_check
      _
    $region15: #{_forward.1} parent=1 // pred_check_branch
      %30 = sbr.rel (0) target = $region17
    $region16: #{_forward.1} parent=1 // pred_region
      %s32 = ssub.s32 2048, 2048
      %33 = vsyncadd [#allocation6], %s32
      %s34 = sshll.u32 [#allocation5], 4
      %s35 = int_to_ptr.vmem [resolvable:$true] %s34
      %40 = dma.hbm_to_vmem [thread:$0]  %s3, 2048, %s35, [#allocation6], 128, 128, 8
    $region17: #{_forward.1} parent=1 // pred_fallthru
      _
    // Predicated region
    $region18: #{_forward.1} parent=1 // pred_check
      _
    $region19: #{_forward.1} parent=1 // pred_check_branch
      %42 = sbr.rel (0) target = $region21
    $region20: #{_forward.1} parent=1 // pred_region
      _
    $region21: #{_forward.1} parent=1 // pred_fallthru
      _
    // Predicated region
    $region22: #{_forward.1} parent=1 // pred_check
      _
    $region23: #{_forward.1} parent=1 // pred_check_branch
      %44 = sbr.rel (0) target = $region25
    $region24: #{_forward.1} parent=1 // pred_region
      %45 = dma.done [#allocation3], 2048
    $region25: #{_forward.1} parent=1 // pred_fallthru
      _
    // Predicated region
    $region26: #{_forward.1} parent=1 // pred_check
      _
    $region27: #{_forward.1} parent=1 // pred_check_branch
      %47 = sbr.rel (0) target = $region29
    $region28: #{_forward.1} parent=1 // pred_region
      %48 = dma.done [#allocation6], 2048
    $region29: #{_forward.1} parent=1 // pred_fallthru
      _
    %v49 = vld [vmem:[%s0] sm:$0xff]
    %v50 = vld [vmem:[#allocation2] sm:$0xff]
    %v51 = vld [vmem:[#allocation2 + $0x8] sm:$0xff]
    %v52 = vld [vmem:[#allocation2 + $0x10] sm:$0xff]
    %v53 = vld [vmem:[#allocation2 + $0x18] sm:$0xff]
    %v54 = vld [vmem:[#allocation2 + $0x20] sm:$0xff]
    %v55 = vld [vmem:[#allocation2 + $0x28] sm:$0xff]
    %v56 = vld [vmem:[#allocation2 + $0x30] sm:$0xff]
    %v57 = vld [vmem:[#allocation2 + $0x38] sm:$0xff]
    %v58 = vld [vmem:[#allocation2 + $0x40] sm:$0xff]
    %v59 = vld [vmem:[#allocation2 + $0x48] sm:$0xff]
    %v60 = vld [vmem:[#allocation2 + $0x50] sm:$0xff]
    %v61 = vld [vmem:[#allocation2 + $0x58] sm:$0xff]
    %v62 = vld [vmem:[#allocation2 + $0x60] sm:$0xff]
    %v63 = vld [vmem:[#allocation2 + $0x68] sm:$0xff]
    %v64 = vld [vmem:[#allocation2 + $0x70] sm:$0xff]
    %v65 = vld [vmem:[#allocation2 + $0x78] sm:$0xff]
    %v66 = vld [vmem:[%s2] sm:$0x1]
    %v68 = vlaneseq
    %v69 = vshrl.u32 %v68, 7
    %v70 = vsub.s32 0, %v69
    %v71 = vrot.slane %v66, %v70
    %73 = vmatprep.subr.mxu0 0.0
    %74 = vmatpush1.msra.mxu0 %v65
    %75 = vmatprep.subr.mxu0 0.0
    %76 = vmatpush1.msra.mxu0 %v64
    %77 = vmatprep.subr.mxu0 0.0
    %78 = vmatpush1.msra.mxu0 %v63
    %79 = vmatprep.subr.mxu0 0.0
    %80 = vmatpush1.msra.mxu0 %v62
    %81 = vmatprep.subr.mxu0 0.0
    %82 = vmatpush1.msra.mxu0 %v61
    %83 = vmatprep.subr.mxu0 0.0
    %84 = vmatpush1.msra.mxu0 %v60
    %85 = vmatprep.subr.mxu0 0.0
    %86 = vmatpush1.msra.mxu0 %v59
    %87 = vmatprep.subr.mxu0 0.0
    %88 = vmatpush1.msra.mxu0 %v58
    %89 = vmatprep.subr.mxu0 0.0
    %90 = vmatpush1.msra.mxu0 %v57
    %91 = vmatprep.subr.mxu0 0.0
    %92 = vmatpush1.msra.mxu0 %v56
    %93 = vmatprep.subr.mxu0 0.0
    %94 = vmatpush1.msra.mxu0 %v55
    %95 = vmatprep.subr.mxu0 0.0
    %96 = vmatpush1.msra.mxu0 %v54
    %97 = vmatprep.subr.mxu0 0.0
    %98 = vmatpush1.msra.mxu0 %v53
    %99 = vmatprep.subr.mxu0 0.0
    %100 = vmatpush1.msra.mxu0 %v52
    %101 = vmatprep.subr.mxu0 0.0
    %102 = vmatpush1.msra.mxu0 %v51
    %103 = vmatprep.subr.mxu0 0.0
    %104 = vmatpush1.msra.mxu0 %v50
    %105 = vmatprep.subr.mxu0 0.0
    %106 = vmatpush2.msra.mxu0 0.0
    %107 = vmatprep.subr.mxu0 0.0
    %108 = vmatpush2.msra.mxu0 0.0
    %109 = vmatprep.subr.mxu0 0.0
    %110 = vmatpush2.msra.mxu0 0.0
    %111 = vmatprep.subr.mxu0 0.0
    %112 = vmatpush2.msra.mxu0 0.0
    %113 = vmatprep.subr.mxu0 0.0
    %114 = vmatpush2.msra.mxu0 0.0
    %115 = vmatprep.subr.mxu0 0.0
    %116 = vmatpush2.msra.mxu0 0.0
    %117 = vmatprep.subr.mxu0 0.0
    %118 = vmatpush2.msra.mxu0 0.0
    %119 = vmatprep.subr.mxu0 0.0
    %120 = vmatpush2.msra.mxu0 0.0
    %121 = vmatprep.subr.mxu0 0.0
    %122 = vmatpush2.msra.mxu0 0.0
    %123 = vmatprep.subr.mxu0 0.0
    %124 = vmatpush2.msra.mxu0 0.0
    %125 = vmatprep.subr.mxu0 0.0
    %126 = vmatpush2.msra.mxu0 0.0
    %127 = vmatprep.subr.mxu0 0.0
    %128 = vmatpush2.msra.mxu0 0.0
    %129 = vmatprep.subr.mxu0 0.0
    %130 = vmatpush2.msra.mxu0 0.0
    %131 = vmatprep.subr.mxu0 0.0
    %132 = vmatpush2.msra.mxu0 0.0
    %133 = vmatprep.subr.mxu0 0.0
    %134 = vmatpush2.msra.mxu0 0.0
    %135 = vmatprep.subr.mxu0 0.0
    %136 = vmatpush2.msra.mxu0 0.0
    %137 = vmatprep.mubr.f32.mxu0 0.0
    %138 = vmatmul.mubr.f32.gmra.mxu0 %v49
    %v139 = vpop.f32.mrf.mxu0
    %v140 = vadd.f32 %v71, %v139
    %v141 = vpop.f32.mrf.mxu0
    %142 = vdwg.mxu0
    %v143 = vmax.f32 %v140, 0.0
    %v144 = vld [vmem:[#allocation5] sm:$0xff]
    %v145 = vld [vmem:[#allocation5 + $0x8] sm:$0xff]
    %v146 = vld [vmem:[#allocation5 + $0x10] sm:$0xff]
    %v147 = vld [vmem:[#allocation5 + $0x18] sm:$0xff]
    %v148 = vld [vmem:[#allocation5 + $0x20] sm:$0xff]
    %v149 = vld [vmem:[#allocation5 + $0x28] sm:$0xff]
    %v150 = vld [vmem:[#allocation5 + $0x30] sm:$0xff]
    %v151 = vld [vmem:[#allocation5 + $0x38] sm:$0xff]
    %v152 = vld [vmem:[#allocation5 + $0x40] sm:$0xff]
    %v153 = vld [vmem:[#allocation5 + $0x48] sm:$0xff]
    %v154 = vld [vmem:[#allocation5 + $0x50] sm:$0xff]
    %v155 = vld [vmem:[#allocation5 + $0x58] sm:$0xff]
    %v156 = vld [vmem:[#allocation5 + $0x60] sm:$0xff]
    %v157 = vld [vmem:[#allocation5 + $0x68] sm:$0xff]
    %v158 = vld [vmem:[#allocation5 + $0x70] sm:$0xff]
    %v159 = vld [vmem:[#allocation5 + $0x78] sm:$0xff]
    %v160 = vld [vmem:[%s4] sm:$0x1]
    %v162 = vlaneseq
    %v163 = vshrl.u32 %v162, 7
    %v164 = vsub.s32 0, %v163
    %v165 = vrot.slane %v160, %v164
    %167 = vmatprep.subr.mxu0 0.0
    %168 = vmatpush1.msra.mxu0 %v159
    %169 = vmatprep.subr.mxu0 0.0
    %170 = vmatpush1.msra.mxu0 %v158
    %171 = vmatprep.subr.mxu0 0.0
    %172 = vmatpush1.msra.mxu0 %v157
    %173 = vmatprep.subr.mxu0 0.0
    %174 = vmatpush1.msra.mxu0 %v156
    %175 = vmatprep.subr.mxu0 0.0
    %176 = vmatpush1.msra.mxu0 %v155
    %177 = vmatprep.subr.mxu0 0.0
    %178 = vmatpush1.msra.mxu0 %v154
    %179 = vmatprep.subr.mxu0 0.0
    %180 = vmatpush1.msra.mxu0 %v153
    %181 = vmatprep.subr.mxu0 0.0
    %182 = vmatpush1.msra.mxu0 %v152
    %183 = vmatprep.subr.mxu0 0.0
    %184 = vmatpush1.msra.mxu0 %v151
    %185 = vmatprep.subr.mxu0 0.0
    %186 = vmatpush1.msra.mxu0 %v150
    %187 = vmatprep.subr.mxu0 0.0
    %188 = vmatpush1.msra.mxu0 %v149
    %189 = vmatprep.subr.mxu0 0.0
    %190 = vmatpush1.msra.mxu0 %v148
    %191 = vmatprep.subr.mxu0 0.0
    %192 = vmatpush1.msra.mxu0 %v147
    %193 = vmatprep.subr.mxu0 0.0
    %194 = vmatpush1.msra.mxu0 %v146
    %195 = vmatprep.subr.mxu0 0.0
    %196 = vmatpush1.msra.mxu0 %v145
    %197 = vmatprep.subr.mxu0 0.0
    %198 = vmatpush1.msra.mxu0 %v144
    %199 = vmatprep.subr.mxu0 0.0
    %200 = vmatpush2.msra.mxu0 0.0
    %201 = vmatprep.subr.mxu0 0.0
    %202 = vmatpush2.msra.mxu0 0.0
    %203 = vmatprep.subr.mxu0 0.0
    %204 = vmatpush2.msra.mxu0 0.0
    %205 = vmatprep.subr.mxu0 0.0
    %206 = vmatpush2.msra.mxu0 0.0
    %207 = vmatprep.subr.mxu0 0.0
    %208 = vmatpush2.msra.mxu0 0.0
    %209 = vmatprep.subr.mxu0 0.0
    %210 = vmatpush2.msra.mxu0 0.0
    %211 = vmatprep.subr.mxu0 0.0
    %212 = vmatpush2.msra.mxu0 0.0
    %213 = vmatprep.subr.mxu0 0.0
    %214 = vmatpush2.msra.mxu0 0.0
    %215 = vmatprep.subr.mxu0 0.0
    %216 = vmatpush2.msra.mxu0 0.0
    %217 = vmatprep.subr.mxu0 0.0
    %218 = vmatpush2.msra.mxu0 0.0
    %219 = vmatprep.subr.mxu0 0.0
    %220 = vmatpush2.msra.mxu0 0.0
    %221 = vmatprep.subr.mxu0 0.0
    %222 = vmatpush2.msra.mxu0 0.0
    %223 = vmatprep.subr.mxu0 0.0
    %224 = vmatpush2.msra.mxu0 0.0
    %225 = vmatprep.subr.mxu0 0.0
    %226 = vmatpush2.msra.mxu0 0.0
    %227 = vmatprep.subr.mxu0 0.0
    %228 = vmatpush2.msra.mxu0 0.0
    %229 = vmatprep.subr.mxu0 0.0
    %230 = vmatpush2.msra.mxu0 0.0
    %231 = vmatprep.mubr.f32.mxu0 0.0
    %232 = vmatmul.mubr.f32.gmra.mxu0 %v143
    %v233 = vpop.f32.mrf.mxu0
    %v234 = vadd.f32 %v165, %v233
    %v235 = vpop.f32.mrf.mxu0
    %236 = vdwg.mxu0
    %v237 = vxor.u32 %v234, 2147483648
    %v238 = vmul.f32 %v237, 1.442695
    %v239 = vpow.pop %v238
    %v240 = vadd.f32 %v239, 1.0
    %v241 = vrcp.pop %v240
    %v242 = vmul.f32 1.0, %v241
    %243 = vst [vmem:[#allocation7] sm:$0xff] %v242
    // Predicated region
    $region30: #{_forward.1} parent=1 // pred_check
      _
    $region31: #{_forward.1} parent=1 // pred_check_branch
      %245 = sbr.rel (0) target = $region33
    $region32: #{_forward.1} parent=1 // pred_region
      %s247 = ssub.s32 128, 128
      %248 = vsyncadd [#allocation4], %s247
      %s250 = sshll.u32 [#allocation7], 4
      %s251 = int_to_ptr.vmem [resolvable:$true] %s250
      %253 = dma.vmem_to_hbm [thread:$0]  %s251, 128, %s5, [#allocation4]
    $region33: #{_forward.1} parent=1 // pred_fallthru
      _
    // Predicated region
    $region34: #{_forward.1} parent=1 // pred_check
      _
    $region35: #{_forward.1} parent=1 // pred_check_branch
      %255 = sbr.rel (0) target = $region37
    $region36: #{_forward.1} parent=1 // pred_region
      %256 = dma.done [#allocation4], 128
    $region37: #{_forward.1} parent=1 // pred_fallthru
      _
    %257 = vsyncpa [#allocation3], 1
    %258 = vsyncpa [#allocation6], 1
    %259 = vsyncpa [#allocation4], 1

</llo_original>
